<compile_context>
chip_gen: v5e
topology: v5e:2x2
jax: 0.10.0
libtpu: 0.0.40
codegen_flags: <defaults>
</compile_context>

<pallas_src>
import jax
import jax.numpy as jnp
from jax.experimental import pallas as pl
from jax.experimental.pallas import tpu as pltpu


def _feature_dropout_kernel(keep_ref, x_ref, o_ref):
    # keep_ref: VMEM (TR, 1)  -- 0.0 / 1.0 per feature-map row (x dtype)
    # x_ref:    VMEM (TR, TS) -- lane-dense tile of the (R, S) slab
    # o_ref:    VMEM (TR, TS)
    o_ref[...] = x_ref[...] * keep_ref[...]   # sublane-broadcast multiply over lanes


def _round_down(v, m):
    return (v // m) * m


def _choose_tiles(R, S, itemsize, *, target_bytes=8 * 1024 * 1024):
    """Pick (TR, TS) row/lane tile sizes for the (R, S) slab (S multiple of 128)."""
    sub = max(8, 32 // itemsize)              # dtype-native sublane packing (8/16/32)

    # Lane tile: split S (in multiples of 128) if one sublane stripe overshoots budget.
    TS = S
    if sub * S * itemsize > target_bytes:
        TS = max(128, _round_down(target_bytes // (sub * itemsize), 128))

    # Row tile: as many sublane-aligned rows as fit the budget.
    TR = max(sub, _round_down(target_bytes // (TS * itemsize), sub))
    if TR >= R:
        TR = R                                # full extent -> always a legal block dim

    # Force a multi-step grid for large slabs so double-buffering / megacore help.
    total_bytes = R * S * itemsize
    desired_steps = min(8, max(1, total_bytes // (2 * 1024 * 1024)))

    def steps(tr, ts):
        return pl.cdiv(R, tr) * pl.cdiv(S, ts)

    while steps(TR, TS) < desired_steps:
        if TR > sub:
            TR = max(sub, _round_down(TR // 2, sub))
        elif TS > 128:
            TS = max(128, _round_down(TS // 2, 128))
        else:
            break
    return TR, TS


def feature_dropout_no_scaling(x, keep, training=True, inplace=False):
    """x: (B, C, H, W). keep: (B*C,) 0/1 keep decisions (cast to x dtype)."""
    if not training:
        return x
    B, C, H, W = x.shape
    R, S = B * C, H * W
    itemsize = jnp.dtype(x.dtype).itemsize

    x2 = x.reshape(R, S)                       # one row per feature map
    keep2 = keep.reshape(R, 1).astype(x.dtype)

    # Guarantee a lane-dense (multiple-of-128) last dim -> unmasked vst.
    # TODO(synk): refold W into 128-lane groups instead of padding for very ragged H*W.
    S_pad = pl.cdiv(S, 128) * 128
    padded = S_pad != S
    if padded:
        x2 = jnp.pad(x2, ((0, 0), (0, S_pad - S)))

    TR, TS = _choose_tiles(R, S_pad, itemsize)
    grid = (pl.cdiv(R, TR), pl.cdiv(S_pad, TS))

    cost = pl.CostEstimate(
        flops=R * S_pad,
        transcendentals=0,
        bytes_accessed=2 * R * S_pad * itemsize + R * itemsize,
    )

    extra = {}
    if inplace and not padded:
        # Reuse x2's HBM buffer for the output (caller should donate X).
        extra["input_output_aliases"] = {1: 0}

    out = pl.pallas_call(
        _feature_dropout_kernel,
        out_shape=jax.ShapeDtypeStruct((R, S_pad), x.dtype),
        grid=grid,
        in_specs=[
            pl.BlockSpec((TR, 1), lambda i, j: (i, 0)),    # keep-mask tile
            pl.BlockSpec((TR, TS), lambda i, j: (i, j)),   # x tile
        ],
        out_specs=pl.BlockSpec((TR, TS), lambda i, j: (i, j)),
        compiler_params=pltpu.CompilerParams(
            dimension_semantics=("parallel", "parallel"),
            vmem_limit_bytes=48 * 1024 * 1024,
        ),
        cost_estimate=cost,
        **extra,
    )(keep2, x2)

    if padded:
        out = out[:, :S]
    return out.reshape(B, C, H, W)


class RandomDropout:
    """JAX/Pallas port of PointNet's RandomDropout module."""

    def __init__(self, p=0.5, inplace=False):
        self.p = p
        self.inplace = inplace
        self.train = True

    def __call__(self, X, key):
        if not self.train:
            return X
        B, C, H, W = X.shape
        k_theta, k_mask = jax.random.split(key)
        # theta ~ Uniform(0, p), sampled fresh per forward call.
        theta = jax.random.uniform(k_theta, (), minval=0.0, maxval=self.p)
        # Drop each (b, c) feature map with probability theta (no rescaling).
        u = jax.random.uniform(k_mask, (B * C,), dtype=jnp.float32)
        keep = (u >= theta).astype(X.dtype)
        return feature_dropout_no_scaling(
            X, keep, training=self.train, inplace=self.inplace
        )


if __name__ == "__main__":
    key = jax.random.PRNGKey(0)
    k_x, k_drop, k_x2, k_drop2 = jax.random.split(key, 4)

    # Small NCHW input consistent with a point-feature tensor (lane-friendly S=256).
    x = jax.random.normal(k_x, (2, 4, 16, 16), dtype=jnp.float32)
    module = RandomDropout(p=0.5)
    y = jax.block_until_ready(module(x, k_drop))

    # Sanity: each (b, c) feature map is either exactly preserved or all-zero.
    y2 = y.reshape(8, 256)
    x2 = x.reshape(8, 256)
    row_zero = jnp.all(y2 == 0.0, axis=1)
    row_same = jnp.all(y2 == x2, axis=1)
    assert bool(jnp.all(row_zero | row_same)), "feature-map dropout semantics violated"
    assert y.shape == x.shape and y.dtype == x.dtype

    # Exercise the ragged-S (pad-to-128) path with a bf16 input.
    xb = jax.random.normal(k_x2, (2, 4, 10, 10), dtype=jnp.bfloat16)
    yb = jax.block_until_ready(module(xb, k_drop2))
    yb2 = yb.reshape(8, 100)
    xb2 = xb.reshape(8, 100)
    rz = jnp.all(yb2 == 0.0, axis=1)
    rs = jnp.all(yb2 == xb2, axis=1)
    assert bool(jnp.all(rz | rs)), "ragged-S dropout semantics violated"
    assert yb.shape == xb.shape and yb.dtype == xb.dtype

    # Eval mode is identity.
    module.train = False
    y_eval = jax.block_until_ready(module(x, k_drop))
    assert bool(jnp.all(y_eval == x))

    print("KERNEL_OK")
</pallas_src>

<mosaic_0001>
module attributes {stable_mosaic.version = 11 : i64} {
  func.func @_feature_dropout_kernel(%arg0: i32, %arg1: i32, %arg2: memref<8x1xf32, #tpu.memory_space<vmem>>, %arg3: memref<8x256xf32, #tpu.memory_space<vmem>>, %arg4: memref<8x256xf32, #tpu.memory_space<vmem>>) attributes {dimension_semantics = [#tpu.dimension_semantics<parallel>, #tpu.dimension_semantics<parallel>], iteration_bounds = array<i64: 1, 1>, scalar_prefetch = 0 : i64, scratch_operands = 0 : i64, tpu.core_type = #tpu.core_type<tc>, window_params = [{transform_indices = @transform_0, window_bounds = array<i64: 8, 1>}, {transform_indices = @transform_1, window_bounds = array<i64: 8, 256>}, {transform_indices = @transform_2, window_bounds = array<i64: 8, 256>}]} {
    %c0 = arith.constant 0 : index
    %c0_0 = arith.constant 0 : index
    %0 = vector.load %arg3[%c0, %c0_0] : memref<8x256xf32, #tpu.memory_space<vmem>>, vector<8x256xf32>
    %c0_1 = arith.constant 0 : index
    %c0_2 = arith.constant 0 : index
    %1 = vector.load %arg2[%c0_1, %c0_2] : memref<8x1xf32, #tpu.memory_space<vmem>>, vector<8x1xf32>
    %2 = vector.broadcast %1 : vector<8x1xf32> to vector<8x256xf32>
    %3 = arith.mulf %0, %2 : vector<8x256xf32>
    %c0_3 = arith.constant 0 : index
    %c0_4 = arith.constant 0 : index
    %4 = vector.load %arg4[%c0_3, %c0_4] : memref<8x256xf32, #tpu.memory_space<vmem>>, vector<8x256xf32>
    tpu.vector_store %arg4[%c0_3, %c0_4], %3 {strides = array<i32>} : memref<8x256xf32, #tpu.memory_space<vmem>>, vector<8x256xf32>,
    return
  }
  func.func @transform_0(%arg0: i32, %arg1: i32) -> (i32, i32) {
    %c0_i32 = arith.constant 0 : i32
    %c0_i32_0 = arith.constant 0 : i32
    return %arg0, %c0_i32 : i32, i32
  }
  func.func @transform_1(%arg0: i32, %arg1: i32) -> (i32, i32) {
    %c0_i32 = arith.constant 0 : i32
    return %arg0, %arg1 : i32, i32
  }
  func.func @transform_2(%arg0: i32, %arg1: i32) -> (i32, i32) {
    %c0_i32 = arith.constant 0 : i32
    return %arg0, %arg1 : i32, i32
  }
}

</mosaic_0001>

<llo_original>
// kernel: tpu_custom_call.1
$region0: #{tpu_custom_call.1}
  #allocation0 [shape = 'u32[]', space=smem, size = 0x4, offset = 0x4, fixed_abs, tag = 'smem constant byte address 0x4 - core index']
  #allocation1 [shape = 'u32[72,128]{1,0:T(1,128)}', space=vmem, size = 0x9000, scoped, tag = 'internal scratch']
  %s0 = inlined_call_operand.vmem [shape: f32[8,1], index: 0, kind: input, shape index: {}]
  %s1 = inlined_call_operand.hbm [shape: f32[8,256], index: 1, kind: input, shape index: {}]
  %s2 = inlined_call_operand.hbm [shape: f32[8,256], index: 2, kind: output, shape index: {}]
  %s3 = sld [smem:[#allocation0]]
  $region22: #{tpu_custom_call.1} parent=0
    _
  %s5 = ssub.s32 1, %s3
  %s6 = scalar_select 0, %s5, %s3
  $region1: #{tpu_custom_call.1} parent=0
    #allocation2 [shape = 'u8[8192]{0}', space=vmem, size = 0x2000, scoped, tag = 'input window, operand 1, single buffered']
    #allocation3 [shape = 's32[1]{0}', space=sflag, size = 0x4, scoped, tag = 'scoped memory for tpu_custom_call.1']
    #allocation4 [shape = 's32[1]{0}', space=sflag, size = 0x4, scoped, tag = 'scoped memory for tpu_custom_call.1']
    #allocation5 [shape = 'u8[8192]{0}', space=vmem, size = 0x2000, scoped, tag = 'output window, operand 0, single buffered']
    %7 = vsyncpa [#allocation3], 0
    %8 = vsyncpa [#allocation4], 0
    // Predicated region
    $region2: #{tpu_custom_call.1} parent=1 // pred_check
      _
    $region3: #{tpu_custom_call.1} parent=1 // pred_check_branch
      %10 = sbr.rel (0) target = $region5
    $region4: #{tpu_custom_call.1} parent=1 // pred_region
      _
    $region5: #{tpu_custom_call.1} parent=1 // pred_fallthru
      _
    // Predicated region
    $region6: #{tpu_custom_call.1} parent=1 // pred_check
      _
    $region7: #{tpu_custom_call.1} parent=1 // pred_check_branch
      %12 = sbr.rel (0) target = $region9
    $region8: #{tpu_custom_call.1} parent=1 // pred_region
      %14 = vsyncadd [#allocation3], 0
      %s16 = sshll.u32 %s1, 4
      %s17 = int_to_ptr.hbm [resolvable:$true] %s16
      %s18 = sshll.u32 [#allocation2], 4
      %s19 = int_to_ptr.vmem [resolvable:$true] %s18
      %21 = dma.hbm_to_vmem [thread:$0]  %s17, 256, %s19, [#allocation3]
    $region9: #{tpu_custom_call.1} parent=1 // pred_fallthru
      _
    // Predicated region
    $region10: #{tpu_custom_call.1} parent=1 // pred_check
      _
    $region11: #{tpu_custom_call.1} parent=1 // pred_check_branch
      %23 = sbr.rel (0) target = $region13
    $region12: #{tpu_custom_call.1} parent=1 // pred_region
      %25 = dma.done [#allocation3], 256
    $region13: #{tpu_custom_call.1} parent=1 // pred_fallthru
      _
    %v26 = vld [vmem:[#allocation2] sm:$0xff]
    %v27 = vld [vmem:[#allocation2 + $0x8] sm:$0xff]
    %v28 = vld [vmem:[%s0] sm:$0xff]
    %30 = vset.pattern.permute.xlu0 0
    %31 = vperm.xlu0 %30, %v28
    %v32 = vpop.permute.xlu0 %31
    %v34 = vmul.f32 %v26, %v32
    %v35 = vmul.f32 %v27, %v32
    %36 = vst [vmem:[#allocation5] sm:$0xff] %v34
    %37 = vst [vmem:[#allocation5 + $0x8] sm:$0xff] %v35
    // Predicated region
    $region14: #{tpu_custom_call.1} parent=1 // pred_check
      _
    $region15: #{tpu_custom_call.1} parent=1 // pred_check_branch
      %39 = sbr.rel (0) target = $region17
    $region16: #{tpu_custom_call.1} parent=1 // pred_region
      %41 = vsyncadd [#allocation4], 0
      %s43 = sshll.u32 [#allocation5], 4
      %s44 = int_to_ptr.vmem [resolvable:$true] %s43
      %s45 = sshll.u32 %s2, 4
      %s46 = int_to_ptr.hbm [resolvable:$true] %s45
      %48 = dma.vmem_to_hbm [thread:$0]  %s44, 256, %s46, [#allocation4]
    $region17: #{tpu_custom_call.1} parent=1 // pred_fallthru
      _
    // Predicated region
    $region18: #{tpu_custom_call.1} parent=1 // pred_check
      _
    $region19: #{tpu_custom_call.1} parent=1 // pred_check_branch
      %50 = sbr.rel (0) target = $region21
    $region20: #{tpu_custom_call.1} parent=1 // pred_region
      %52 = dma.done [#allocation4], 256
    $region21: #{tpu_custom_call.1} parent=1 // pred_fallthru
      _
    %53 = vsyncpa [#allocation3], 1
    %54 = vsyncpa [#allocation4], 1

</llo_original>
